<compile_context>
chip_gen: v7x
topology: tpu7x:2x2x1
jax: 0.10.0
libtpu: 0.0.40
codegen_flags: <defaults>
</compile_context>

<pallas_src>
import functools

import jax
import jax.numpy as jnp
import numpy as np
from jax.experimental import pallas as pl
from jax.experimental.pallas import tpu as pltpu


def make_separable_taps(kernel_size=5, gaussian=False):
    """1D separable taps; outer(w, w) reproduces the module's 2D kernel.

    Box filter (AvgPool2d, count_include_pad=True): uniform 1/K per axis, so
    the 2D weight is 1/K^2.  GaussianFilter: 1D Gaussian normalized to sum 1
    (the module's normalized 2D Gaussian is exactly its outer product).
    """
    k = kernel_size
    if not gaussian:
        return np.full((k,), 1.0 / k, dtype=np.float64)
    mean = (k - 1) / 2.0
    variance = (k / 6.0) ** 2.0
    g = np.exp(-((np.arange(k, dtype=np.float64) - mean) ** 2) / (2.0 * variance))
    return g / g.sum()


def _vmem_limit_bytes():
    """Per-generation VMEM limit (v5e/v6e: 128 MiB phys, v7x: 64 MiB phys)."""
    try:
        cap = int(pltpu.get_tpu_info().vmem_capacity_bytes)
    except Exception:  # conservative (v7x-sized) fallback
        cap = 64 * 1024 * 1024
    return max(32 * 1024 * 1024, (cap * 3) // 4)


def _choose_cblk(nc, h, w, hp, wp, itemsize, budget_bytes):
    """Largest channel block that fits the VMEM budget (prefers an even grid)."""

    def footprint(cb):
        io = 4 * cb * h * w * itemsize                  # 2x double-buffered in + out
        scratch = cb * hp * wp * 4 + cb * hp * w * 4    # padded buf + separable tmp
        return io + scratch

    divisors = [d for d in range(1, nc + 1) if nc % d == 0]
    fitting = [d for d in divisors if footprint(d) <= budget_bytes] or [1]
    best = max(fitting)
    even_grid = [d for d in fitting if (nc // d) % 2 == 0]
    if even_grid and 2 * max(even_grid) >= best:
        best = max(even_grid)  # even grid extent keeps both v7x TCs busy
    return best


def _sep_filter_kernel(x_ref, o_ref, xp_ref, tmp_ref, *, taps, pad, recursions):
    """Separable KxK zero-padded stencil over one (Cblk, H, W) channel block.

    x_ref:   (Cblk, H, W)   unpadded input block (VMEM, auto-pipelined)
    o_ref:   (Cblk, H, W)   output block
    xp_ref:  (Cblk, Hp, Wp) f32 scratch, zero halo + image interior
    tmp_ref: (Cblk, Hp, W)  f32 scratch holding the horizontal-pass result
    """
    cblk, h, w = o_ref.shape
    k = len(taps)
    hp = h + 2 * pad
    wp = w + 2 * pad

    if pad > 0:
        # Zero only the halo every step (the scratch persists across grid steps
        # and the interior is fully overwritten below).  Per-step zeroing is
        # safe under megacore sharding of the parallel axis, unlike a
        # program_id(0)==0-gated one-time init.
        xp_ref[:, 0:pad, :] = jnp.zeros((cblk, pad, wp), jnp.float32)
        xp_ref[:, pad + h:hp, :] = jnp.zeros((cblk, pad, wp), jnp.float32)
        xp_ref[:, :, 0:pad] = jnp.zeros((cblk, hp, pad), jnp.float32)
        xp_ref[:, :, pad + w:wp] = jnp.zeros((cblk, hp, pad), jnp.float32)

    xp_ref[:, pad:pad + h, pad:pad + w] = x_ref[...].astype(jnp.float32)

    out = None
    for r in range(recursions):  # fused recursions: VMEM-resident ping-pong
        if r > 0:
            xp_ref[:, pad:pad + h, pad:pad + w] = out
        # Horizontal (lane axis) pass: (cblk, hp, wp) -> (cblk, hp, w).
        acc = np.float32(taps[0]) * xp_ref[:, :, 0:w]
        for dj in range(1, k):
            acc = acc + np.float32(taps[dj]) * xp_ref[:, :, dj:dj + w]
        tmp_ref[...] = acc
        # Vertical (sublane axis) pass: (cblk, hp, w) -> (cblk, h, w).
        out = np.float32(taps[0]) * tmp_ref[:, 0:h, :]
        for di in range(1, k):
            out = out + np.float32(taps[di]) * tmp_ref[:, di:di + h, :]
    o_ref[...] = out.astype(o_ref.dtype)


def filter_low(img, *, recursions=1, kernel_size=5, padding=True, gaussian=False):
    """FilterLow.forward. img: (N, C, H, W). Padded, stride=1 path only."""
    if not padding:
        # TODO(synk): padding=False / stride != 1 (output-cropping) variants not wired up.
        raise NotImplementedError("FilterLow with padding=False is not implemented")

    n, c, h, w = img.shape
    k = kernel_size
    pad = (k - 1) // 2
    hp, wp = h + 2 * pad, w + 2 * pad
    nc = n * c

    taps = tuple(float(v) for v in make_separable_taps(k, gaussian))

    vmem_limit = _vmem_limit_bytes()
    cblk = _choose_cblk(nc, h, w, hp, wp, img.dtype.itemsize,
                        budget_bytes=int(vmem_limit * 0.85))

    x = img.reshape(nc, h, w)  # collapse N*C into one grid axis (free reshape)
    kernel = functools.partial(_sep_filter_kernel, taps=taps, pad=pad,
                               recursions=recursions)

    out = pl.pallas_call(
        kernel,
        out_shape=jax.ShapeDtypeStruct((nc, h, w), img.dtype),
        grid_spec=pltpu.PrefetchScalarGridSpec(
            num_scalar_prefetch=0,
            grid=(nc // cblk,),
            in_specs=[pl.BlockSpec((cblk, h, w), lambda g: (g, 0, 0))],
            out_specs=pl.BlockSpec((cblk, h, w), lambda g: (g, 0, 0)),
            scratch_shapes=[
                pltpu.VMEM((cblk, hp, wp), jnp.float32),  # zero-haloed input
                pltpu.VMEM((cblk, hp, w), jnp.float32),   # horizontal-pass tmp
            ]),
        compiler_params=pltpu.CompilerParams(
            dimension_semantics=("parallel",),
            vmem_limit_bytes=vmem_limit),
    )(x)
    return out.reshape(n, c, h, w)


def _reference_filter_low(img, *, recursions=1, kernel_size=5, gaussian=False):
    """Pure-JAX reference (full 2D tap sum, no Pallas) for a sanity check."""
    w1 = make_separable_taps(kernel_size, gaussian)
    w2 = np.outer(w1, w1)
    pad = (kernel_size - 1) // 2
    n, c, h, w = img.shape
    for _ in range(recursions):
        xp = jnp.pad(img.astype(jnp.float32),
                     ((0, 0), (0, 0), (pad, pad), (pad, pad)))
        acc = jnp.zeros((n, c, h, w), jnp.float32)
        for di in range(kernel_size):
            for dj in range(kernel_size):
                acc = acc + np.float32(w2[di, dj]) * xp[:, :, di:di + h, dj:dj + w]
        img = acc.astype(img.dtype)
    return img


if __name__ == "__main__":
    key = jax.random.PRNGKey(0)
    # 3-channel NCHW images, consistent with the module (GaussianFilter is 3-ch).
    x = jax.random.normal(key, (2, 3, 16, 16), dtype=jnp.float32)

    # Default FilterLow: 5x5 average pooling, recursions=1.
    out = jax.block_until_ready(filter_low(x))
    ref = _reference_filter_low(x)
    np.testing.assert_allclose(np.asarray(out), np.asarray(ref), rtol=1e-5, atol=1e-5)

    # Gaussian branch.
    out_g = jax.block_until_ready(filter_low(x, gaussian=True))
    ref_g = _reference_filter_low(x, gaussian=True)
    np.testing.assert_allclose(np.asarray(out_g), np.asarray(ref_g), rtol=1e-5, atol=1e-5)

    # Fused recursions path.
    out_r = jax.block_until_ready(filter_low(x, recursions=2))
    ref_r = _reference_filter_low(x, recursions=2)
    np.testing.assert_allclose(np.asarray(out_r), np.asarray(ref_r), rtol=1e-5, atol=1e-5)

    print("KERNEL_OK")
</pallas_src>

<mosaic_0001>
module attributes {stable_mosaic.version = 11 : i64} {
  func.func @_sep_filter_kernel(%arg0: i32, %arg1: memref<3x16x16xf32, #tpu.memory_space<vmem>>, %arg2: memref<3x16x16xf32, #tpu.memory_space<vmem>>, %arg3: memref<3x20x20xf32, #tpu.memory_space<vmem>>, %arg4: memref<3x20x16xf32, #tpu.memory_space<vmem>>) attributes {dimension_semantics = [#tpu.dimension_semantics<parallel>], iteration_bounds = array<i64: 2>, scalar_prefetch = 0 : i64, scratch_operands = 2 : i64, tpu.core_type = #tpu.core_type<tc>, window_params = [{transform_indices = @transform_0, window_bounds = array<i64: 3, 16, 16>}, {transform_indices = @transform_1, window_bounds = array<i64: 3, 16, 16>}]} {
    %cst = arith.constant 0.000000e+00 : f32
    %0 = vector.broadcast %cst : f32 to vector<3x2x20xf32>
    %c0 = arith.constant 0 : index
    %c0_0 = arith.constant 0 : index
    %c0_1 = arith.constant 0 : index
    %1 = vector.load %arg3[%c0, %c0_0, %c0_1] : memref<3x20x20xf32, #tpu.memory_space<vmem>>, vector<3x2x20xf32>
    tpu.vector_store %arg3[%c0, %c0_0, %c0_1], %0 {strides = array<i32>} : memref<3x20x20xf32, #tpu.memory_space<vmem>>, vector<3x2x20xf32>,
    %cst_2 = arith.constant 0.000000e+00 : f32
    %2 = vector.broadcast %cst_2 : f32 to vector<3x2x20xf32>
    %c0_3 = arith.constant 0 : index
    %c18 = arith.constant 18 : index
    %c0_4 = arith.constant 0 : index
    %3 = vector.load %arg3[%c0_3, %c18, %c0_4] : memref<3x20x20xf32, #tpu.memory_space<vmem>>, vector<3x2x20xf32>
    tpu.vector_store %arg3[%c0_3, %c18, %c0_4], %2 {strides = array<i32>} : memref<3x20x20xf32, #tpu.memory_space<vmem>>, vector<3x2x20xf32>,
    %cst_5 = arith.constant 0.000000e+00 : f32
    %4 = vector.broadcast %cst_5 : f32 to vector<3x20x2xf32>
    %c0_6 = arith.constant 0 : index
    %c0_7 = arith.constant 0 : index
    %c0_8 = arith.constant 0 : index
    %5 = vector.load %arg3[%c0_6, %c0_7, %c0_8] : memref<3x20x20xf32, #tpu.memory_space<vmem>>, vector<3x20x2xf32>
    tpu.vector_store %arg3[%c0_6, %c0_7, %c0_8], %4 {strides = array<i32>} : memref<3x20x20xf32, #tpu.memory_space<vmem>>, vector<3x20x2xf32>,
    %cst_9 = arith.constant 0.000000e+00 : f32
    %6 = vector.broadcast %cst_9 : f32 to vector<3x20x2xf32>
    %c0_10 = arith.constant 0 : index
    %c0_11 = arith.constant 0 : index
    %c18_12 = arith.constant 18 : index
    %7 = vector.load %arg3[%c0_10, %c0_11, %c18_12] : memref<3x20x20xf32, #tpu.memory_space<vmem>>, vector<3x20x2xf32>
    tpu.vector_store %arg3[%c0_10, %c0_11, %c18_12], %6 {strides = array<i32>} : memref<3x20x20xf32, #tpu.memory_space<vmem>>, vector<3x20x2xf32>,
    %c0_13 = arith.constant 0 : index
    %c0_14 = arith.constant 0 : index
    %c0_15 = arith.constant 0 : index
    %8 = vector.load %arg1[%c0_13, %c0_14, %c0_15] : memref<3x16x16xf32, #tpu.memory_space<vmem>>, vector<3x16x16xf32>
    %c0_16 = arith.constant 0 : index
    %c2 = arith.constant 2 : index
    %c2_17 = arith.constant 2 : index
    %9 = vector.load %arg3[%c0_16, %c2, %c2_17] : memref<3x20x20xf32, #tpu.memory_space<vmem>>, vector<3x16x16xf32>
    tpu.vector_store %arg3[%c0_16, %c2, %c2_17], %8 {strides = array<i32>} : memref<3x20x20xf32, #tpu.memory_space<vmem>>, vector<3x16x16xf32>,
    %c0_18 = arith.constant 0 : index
    %c0_19 = arith.constant 0 : index
    %c0_20 = arith.constant 0 : index
    %10 = vector.load %arg3[%c0_18, %c0_19, %c0_20] : memref<3x20x20xf32, #tpu.memory_space<vmem>>, vector<3x20x16xf32>
    %cst_21 = arith.constant 2.000000e-01 : f32
    %11 = vector.broadcast %cst_21 : f32 to vector<3x20x16xf32>
    %12 = arith.mulf %11, %10 : vector<3x20x16xf32>
    %c0_22 = arith.constant 0 : index
    %c0_23 = arith.constant 0 : index
    %c1 = arith.constant 1 : index
    %13 = vector.load %arg3[%c0_22, %c0_23, %c1] : memref<3x20x20xf32, #tpu.memory_space<vmem>>, vector<3x20x16xf32>
    %cst_24 = arith.constant 2.000000e-01 : f32
    %14 = vector.broadcast %cst_24 : f32 to vector<3x20x16xf32>
    %15 = arith.mulf %14, %13 : vector<3x20x16xf32>
    %16 = arith.addf %12, %15 : vector<3x20x16xf32>
    %c0_25 = arith.constant 0 : index
    %c0_26 = arith.constant 0 : index
    %c2_27 = arith.constant 2 : index
    %17 = vector.load %arg3[%c0_25, %c0_26, %c2_27] : memref<3x20x20xf32, #tpu.memory_space<vmem>>, vector<3x20x16xf32>
    %cst_28 = arith.constant 2.000000e-01 : f32
    %18 = vector.broadcast %cst_28 : f32 to vector<3x20x16xf32>
    %19 = arith.mulf %18, %17 : vector<3x20x16xf32>
    %20 = arith.addf %16, %19 : vector<3x20x16xf32>
    %c0_29 = arith.constant 0 : index
    %c0_30 = arith.constant 0 : index
    %c3 = arith.constant 3 : index
    %21 = vector.load %arg3[%c0_29, %c0_30, %c3] : memref<3x20x20xf32, #tpu.memory_space<vmem>>, vector<3x20x16xf32>
    %cst_31 = arith.constant 2.000000e-01 : f32
    %22 = vector.broadcast %cst_31 : f32 to vector<3x20x16xf32>
    %23 = arith.mulf %22, %21 : vector<3x20x16xf32>
    %24 = arith.addf %20, %23 : vector<3x20x16xf32>
    %c0_32 = arith.constant 0 : index
    %c0_33 = arith.constant 0 : index
    %c4 = arith.constant 4 : index
    %25 = vector.load %arg3[%c0_32, %c0_33, %c4] : memref<3x20x20xf32, #tpu.memory_space<vmem>>, vector<3x20x16xf32>
    %cst_34 = arith.constant 2.000000e-01 : f32
    %26 = vector.broadcast %cst_34 : f32 to vector<3x20x16xf32>
    %27 = arith.mulf %26, %25 : vector<3x20x16xf32>
    %28 = arith.addf %24, %27 : vector<3x20x16xf32>
    %c0_35 = arith.constant 0 : index
    %c0_36 = arith.constant 0 : index
    %c0_37 = arith.constant 0 : index
    %29 = vector.load %arg4[%c0_35, %c0_36, %c0_37] : memref<3x20x16xf32, #tpu.memory_space<vmem>>, vector<3x20x16xf32>
    tpu.vector_store %arg4[%c0_35, %c0_36, %c0_37], %28 {strides = array<i32>} : memref<3x20x16xf32, #tpu.memory_space<vmem>>, vector<3x20x16xf32>,
    %c0_38 = arith.constant 0 : index
    %c0_39 = arith.constant 0 : index
    %c0_40 = arith.constant 0 : index
    %30 = vector.load %arg4[%c0_38, %c0_39, %c0_40] : memref<3x20x16xf32, #tpu.memory_space<vmem>>, vector<3x16x16xf32>
    %cst_41 = arith.constant 2.000000e-01 : f32
    %31 = vector.broadcast %cst_41 : f32 to vector<3x16x16xf32>
    %32 = arith.mulf %31, %30 : vector<3x16x16xf32>
    %c0_42 = arith.constant 0 : index
    %c1_43 = arith.constant 1 : index
    %c0_44 = arith.constant 0 : index
    %33 = vector.load %arg4[%c0_42, %c1_43, %c0_44] : memref<3x20x16xf32, #tpu.memory_space<vmem>>, vector<3x16x16xf32>
    %cst_45 = arith.constant 2.000000e-01 : f32
    %34 = vector.broadcast %cst_45 : f32 to vector<3x16x16xf32>
    %35 = arith.mulf %34, %33 : vector<3x16x16xf32>
    %36 = arith.addf %32, %35 : vector<3x16x16xf32>
    %c0_46 = arith.constant 0 : index
    %c2_47 = arith.constant 2 : index
    %c0_48 = arith.constant 0 : index
    %37 = vector.load %arg4[%c0_46, %c2_47, %c0_48] : memref<3x20x16xf32, #tpu.memory_space<vmem>>, vector<3x16x16xf32>
    %cst_49 = arith.constant 2.000000e-01 : f32
    %38 = vector.broadcast %cst_49 : f32 to vector<3x16x16xf32>
    %39 = arith.mulf %38, %37 : vector<3x16x16xf32>
    %40 = arith.addf %36, %39 : vector<3x16x16xf32>
    %c0_50 = arith.constant 0 : index
    %c3_51 = arith.constant 3 : index
    %c0_52 = arith.constant 0 : index
    %41 = vector.load %arg4[%c0_50, %c3_51, %c0_52] : memref<3x20x16xf32, #tpu.memory_space<vmem>>, vector<3x16x16xf32>
    %cst_53 = arith.constant 2.000000e-01 : f32
    %42 = vector.broadcast %cst_53 : f32 to vector<3x16x16xf32>
    %43 = arith.mulf %42, %41 : vector<3x16x16xf32>
    %44 = arith.addf %40, %43 : vector<3x16x16xf32>
    %c0_54 = arith.constant 0 : index
    %c4_55 = arith.constant 4 : index
    %c0_56 = arith.constant 0 : index
    %45 = vector.load %arg4[%c0_54, %c4_55, %c0_56] : memref<3x20x16xf32, #tpu.memory_space<vmem>>, vector<3x16x16xf32>
    %cst_57 = arith.constant 2.000000e-01 : f32
    %46 = vector.broadcast %cst_57 : f32 to vector<3x16x16xf32>
    %47 = arith.mulf %46, %45 : vector<3x16x16xf32>
    %48 = arith.addf %44, %47 : vector<3x16x16xf32>
    %c0_58 = arith.constant 0 : index
    %c0_59 = arith.constant 0 : index
    %c0_60 = arith.constant 0 : index
    %49 = vector.load %arg2[%c0_58, %c0_59, %c0_60] : memref<3x16x16xf32, #tpu.memory_space<vmem>>, vector<3x16x16xf32>
    tpu.vector_store %arg2[%c0_58, %c0_59, %c0_60], %48 {strides = array<i32>} : memref<3x16x16xf32, #tpu.memory_space<vmem>>, vector<3x16x16xf32>,
    return
  }
  func.func @transform_0(%arg0: i32) -> (i32, i32, i32) {
    %c0_i32 = arith.constant 0 : i32
    %c0_i32_0 = arith.constant 0 : i32
    %c0_i32_1 = arith.constant 0 : i32
    return %arg0, %c0_i32, %c0_i32_0 : i32, i32, i32
  }
  func.func @transform_1(%arg0: i32) -> (i32, i32, i32) {
    %c0_i32 = arith.constant 0 : i32
    %c0_i32_0 = arith.constant 0 : i32
    %c0_i32_1 = arith.constant 0 : i32
    return %arg0, %c0_i32, %c0_i32_0 : i32, i32, i32
  }
}

</mosaic_0001>

<llo_original>
// kernel: tpu_custom_call.1
$region0: #{tpu_custom_call.1}
  #allocation0 [shape = 'u32[]', space=smem, size = 0x4, offset = 0x4, fixed_abs, tag = 'smem constant byte address 0x4 - core index']
  #allocation1 [shape = 'u32[144,128]{1,0:T(1,128)}', space=vmem, size = 0x12000, scoped, tag = 'internal scratch']
  #allocation2 [shape = 'f32[3,20,20]{2,1,0:T(8,128)}', space=vmem, size = 0x9000, scoped, tag = 'scratch operand']
  #allocation3 [shape = 'f32[3,20,16]{2,1,0:T(8,128)}', space=vmem, size = 0x9000, scoped, tag = 'scratch operand']
  %s0 = inlined_call_operand.hbm [shape: f32[6,16,16], index: 0, kind: input, shape index: {}]
  %s1 = inlined_call_operand.hbm [shape: f32[6,16,16], index: 1, kind: output, shape index: {}]
  %s2 = sld [smem:[#allocation0]]
  $region41: #{tpu_custom_call.1} parent=0
    _
  %s4 = ssub.s32 1, %s2
  %s5 = scalar_select 0, %s4, %s2
  $region1: #{tpu_custom_call.1} parent=0
    #allocation4 [shape = 'u8[49152]{0}', space=vmem, size = 0xc000, scoped, tag = 'input window, operand 0']
    #allocation5 [shape = 's32[2]{0}', space=sflag, size = 0x8, scoped, tag = 'scoped memory for tpu_custom_call.1']
    #allocation6 [shape = 's32[2]{0}', space=sflag, size = 0x8, scoped, tag = 'scoped memory for tpu_custom_call.1']
    #allocation7 [shape = 'u8[49152]{0}', space=vmem, size = 0xc000, scoped, tag = 'output window, operand 0']
    %6 = vsyncpa [#allocation5], 0
    %s7 = scalar_lea.sflag [#allocation5], 1
    %8 = vsyncpa %s7, 0
    %9 = vsyncpa [#allocation6], 0
    %s10 = scalar_lea.sflag [#allocation6], 1
    %11 = vsyncpa %s10, 0
    loop: start=0, step=1, limit=4
    $region2: #{tpu_custom_call.1} parent=1 // loop_pre_header
      _
    $region3: #{tpu_custom_call.1} parent=1 // loop_header
      %s13 = sphi 0, %s17
      %p14 = scmp.ge.s32.totalorder %s13, 4
      %s23 = sphi 0, %s25
      %s26 = sphi 0, %s23
      %s27 = sphi 0, %s26
      %s43 = sphi 0, %s27
      %s49 = sphi 0, %s51
      %s52 = sphi 0, %s49
      %s53 = sphi 0, %s52
      %s69 = sphi 0, %s53
    $region4: #{tpu_custom_call.1} parent=1 // loop_header_branch
      %16 = sbr.rel (%p14) target = $region8
    $region5: #{tpu_custom_call.1} parent=1 // loop_body
      %s18 = ssub.s32 %s13, 1
      %s19 = ssub.s32 %s13, 2
      %s20 = sadd.s32 %s13, 1
      %s21 = ssub.s32 %s13, %s20
      %p22 = scmp.eq.s32.totalorder %s21, 0
      %s24 = sadd.s32 %s23, 1
      %s25 = scalar_select %p22, %s23, %s24
      %p28 = pneg %p22
      %p29 = scmp.eq.s32.totalorder %s13, 1
      %p30 = por %p28, %p29
      %p31 = scmp.ne.s32.totalorder %s23, %s26
      %p32 = scmp.eq.s32.totalorder %s13, 0
      %p33 = por %p31, %p32
      %p34 = scmp.ne.s32.totalorder %s23, %s26
      %p35 = scmp.eq.s32.totalorder %s18, 1
      %p36 = por %p34, %p35
      %p37 = scmp.ne.s32.totalorder %s26, %s27
      %p38 = scmp.eq.s32.totalorder %s18, 0
      %p39 = por %p37, %p38
      %p40 = scmp.ne.s32.totalorder %s26, %s27
      %p41 = scmp.eq.s32.totalorder %s19, 1
      %p42 = por %p40, %p41
      %p44 = scmp.ne.s32.totalorder %s27, %s43
      %p45 = scmp.eq.s32.totalorder %s19, 0
      %p46 = por %p44, %p45
      %s47 = ssub.s32 %s13, %s20
      %p48 = scmp.eq.s32.totalorder %s47, 0
      %s50 = sadd.s32 %s49, 1
      %s51 = scalar_select %p48, %s49, %s50
      %p54 = pneg %p48
      %p55 = scmp.eq.s32.totalorder %s13, 1
      %p56 = por %p54, %p55
      %p57 = scmp.ne.s32.totalorder %s49, %s52
      %p58 = scmp.eq.s32.totalorder %s13, 0
      %p59 = por %p57, %p58
      %p60 = scmp.ne.s32.totalorder %s49, %s52
      %p61 = scmp.eq.s32.totalorder %s18, 1
      %p62 = por %p60, %p61
      %p63 = scmp.ne.s32.totalorder %s52, %s53
      %p64 = scmp.eq.s32.totalorder %s18, 0
      %p65 = por %p63, %p64
      %p66 = scmp.ne.s32.totalorder %s52, %s53
      %p67 = scmp.eq.s32.totalorder %s19, 1
      %p68 = por %p66, %p67
      %p70 = scmp.ne.s32.totalorder %s53, %s69
      %p71 = scmp.eq.s32.totalorder %s19, 0
      %p72 = por %p70, %p71
      %p73 = scmp.le.s32.totalorder 1, %s13
      %p74 = scmp.lt.s32.totalorder %s13, 3
      %p75 = pnand %p73, %p74
      %p76 = pneg %p75
      // Predicated region
      $region9: #{tpu_custom_call.1} parent=5 // pred_check
        _
      $region10: #{tpu_custom_call.1} parent=5 // pred_check_branch
        %78 = sbr.rel (%p75) target = $region12
      $region11: #{tpu_custom_call.1} parent=5 // pred_region
        %s79 = ssub.s32 %s13, 1
      $region12: #{tpu_custom_call.1} parent=5 // pred_fallthru
        _
      %p80 = scmp.lt.s32.totalorder %s13, 2
      // Predicated region
      $region13: #{tpu_custom_call.1} parent=5 // pred_check
        %p81 = pneg %p80
      $region14: #{tpu_custom_call.1} parent=5 // pred_check_branch
        %83 = sbr.rel (%p81) target = $region16
      $region15: #{tpu_custom_call.1} parent=5 // pred_region
        // Predicated region
        $region17: #{tpu_custom_call.1} parent=15 // pred_check
          %p84 = pneg %p33
        $region18: #{tpu_custom_call.1} parent=15 // pred_check_branch
          %86 = sbr.rel (%p84) target = $region20
        $region19: #{tpu_custom_call.1} parent=15 // pred_region
          %s87 = sand.u32 %s23, 1
          %s88 = scalar_lea.sflag [#allocation5], %s87
          %s89 = sand.u32 %s23, 1
          %s90 = smul.addr %s89, 48
          %s91 = scalar_lea.vmem [#allocation4], %s90
          %s92 = smul.u32 3, %s13
          %s94 = ssub.s32 768, 768
          %95 = vsyncadd %s88, %s94
          %s96 = smul.addr %s92, 2
          %s97 = smul.addr %s96, 128
          %s98 = scalar_lea.hbm %s0, %s97
          %s99 = sshll.u32 %s91, 4
          %s100 = int_to_ptr.vmem [resolvable:$true] %s99
          %105 = dma.hbm_to_vmem [thread:$0]  %s98, 768, %s100, %s88, 128, 128, 8
        $region20: #{tpu_custom_call.1} parent=15 // pred_fallthru
          _
      $region16: #{tpu_custom_call.1} parent=5 // pred_fallthru
        _
      %p106 = scmp.le.s32.totalorder 1, %s13
      %p107 = scmp.lt.s32.totalorder %s13, 3
      %p108 = pnand %p106, %p107
      %p109 = pneg %p108
      // Predicated region
      $region21: #{tpu_custom_call.1} parent=5 // pred_check
        _
      $region22: #{tpu_custom_call.1} parent=5 // pred_check_branch
        %111 = sbr.rel (%p108) target = $region24
      $region23: #{tpu_custom_call.1} parent=5 // pred_region
        %s112 = ssub.s32 %s13, 1
        %s113 = sand.u32 %s26, 1
        %s114 = scalar_lea.sflag [#allocation5], %s113
        %s115 = sand.u32 %s26, 1
        %s116 = smul.addr %s115, 48
        %s117 = scalar_lea.vmem [#allocation4], %s116
        // Predicated region
        $region25: #{tpu_custom_call.1} parent=23 // pred_check
          %p118 = pneg %p39
        $region26: #{tpu_custom_call.1} parent=23 // pred_check_branch
          %120 = sbr.rel (%p118) target = $region28
        $region27: #{tpu_custom_call.1} parent=23 // pred_region
          %121 = dma.done %s114, 768
        $region28: #{tpu_custom_call.1} parent=23 // pred_fallthru
          _
        %s122 = sand.u32 %s26, 1
        %s123 = scalar_lea.sflag [#allocation5], %s122
        %s124 = sand.u32 %s26, 1
        %s125 = smul.addr %s124, 48
        %s126 = scalar_lea.vmem [#allocation4], %s125
        %p127 = pneg %p39
        %p128 = pneg %p36
        %p129 = pneg %p65
        %p130 = pneg %p62
        %s131 = sand.u32 %s52, 1
        %s132 = scalar_lea.sflag [#allocation6], %s131
        %s133 = sand.u32 %s52, 1
        %s134 = smul.addr %s133, 48
        %s135 = scalar_lea.vmem [#allocation7], %s134
        %s136 = smul.u32 3, %s18
        %s137 = smul.u32 3, %s18
        %vm138 = vcmask 156672
        %139 = vst.msk [vmem:[#allocation2] sm:$0x3] %vm138, 0.0
        %140 = vst.msk [vmem:[#allocation2 + $0x18] sm:$0x3] %vm138, 0.0
        %141 = vst.msk [vmem:[#allocation2 + $0x30] sm:$0x3] %vm138, 0.0
        %142 = vst.msk [vmem:[#allocation2 + $0x12] sm:$0x3] %vm138, 0.0
        %143 = vst.msk [vmem:[#allocation2 + $0x2a] sm:$0x3] %vm138, 0.0
        %144 = vst.msk [vmem:[#allocation2 + $0x42] sm:$0x3] %vm138, 0.0
        %vm145 = vcmask 15360
        %146 = vst.msk [vmem:[#allocation2] sm:$0xff] %vm145, 0.0
        %147 = vst.msk [vmem:[#allocation2 + $0x8] sm:$0xff] %vm145, 0.0
        %vm148 = vcmask 11264
        %149 = vst.msk [vmem:[#allocation2 + $0x10] sm:$0xf] %vm148, 0.0
        %150 = vst.msk [vmem:[#allocation2 + $0x18] sm:$0xff] %vm145, 0.0
        %151 = vst.msk [vmem:[#allocation2 + $0x20] sm:$0xff] %vm145, 0.0
        %152 = vst.msk [vmem:[#allocation2 + $0x28] sm:$0xf] %vm148, 0.0
        %153 = vst.msk [vmem:[#allocation2 + $0x30] sm:$0xff] %vm145, 0.0
        %154 = vst.msk [vmem:[#allocation2 + $0x38] sm:$0xff] %vm145, 0.0
        %155 = vst.msk [vmem:[#allocation2 + $0x40] sm:$0xf] %vm148, 0.0
        %vm156 = vcmask 162960
        %157 = vst.msk [vmem:[#allocation2] sm:$0xff] %vm156, 0.0
        %158 = vst.msk [vmem:[#allocation2 + $0x8] sm:$0xff] %vm156, 0.0
        %vm159 = vcmask 158864
        %160 = vst.msk [vmem:[#allocation2 + $0x10] sm:$0xf] %vm159, 0.0
        %161 = vst.msk [vmem:[#allocation2 + $0x18] sm:$0xff] %vm156, 0.0
        %162 = vst.msk [vmem:[#allocation2 + $0x20] sm:$0xff] %vm156, 0.0
        %163 = vst.msk [vmem:[#allocation2 + $0x28] sm:$0xf] %vm159, 0.0
        %164 = vst.msk [vmem:[#allocation2 + $0x30] sm:$0xff] %vm156, 0.0
        %165 = vst.msk [vmem:[#allocation2 + $0x38] sm:$0xff] %vm156, 0.0
        %166 = vst.msk [vmem:[#allocation2 + $0x40] sm:$0xf] %vm159, 0.0
        %v167 = vld [vmem:[%s117] sm:$0xff]
        %v168 = vld [vmem:[%s117 + $0x8] sm:$0xff]
        %v169 = vld [vmem:[%s117 + $0x10] sm:$0xff]
        %v170 = vld [vmem:[%s117 + $0x18] sm:$0xff]
        %v171 = vld [vmem:[%s117 + $0x20] sm:$0xff]
        %v172 = vld [vmem:[%s117 + $0x28] sm:$0xff]
        %179 = vrot.lane.b32.xlu0 %v167, 2
        %v180 = vpop.permute.xlu0 %179
        %181 = vrot.lane.b32.xlu0 %v168, 2
        %v182 = vpop.permute.xlu0 %181
        %183 = vrot.lane.b32.xlu0 %v169, 2
        %v184 = vpop.permute.xlu0 %183
        %185 = vrot.lane.b32.xlu0 %v170, 2
        %v186 = vpop.permute.xlu0 %185
        %187 = vrot.lane.b32.xlu0 %v171, 2
        %v188 = vpop.permute.xlu0 %187
        %189 = vrot.lane.b32.xlu0 %v172, 2
        %v190 = vpop.permute.xlu0 %189
        %vm197 = vcmask 146448
        %198 = vst.msk [vmem:[#allocation2 + $0x2] sm:$0xff] %vm197, %v180
        %199 = vst.msk [vmem:[#allocation2 + $0xa] sm:$0xff] %vm197, %v182
        %200 = vst.msk [vmem:[#allocation2 + $0x1a] sm:$0xff] %vm197, %v184
        %201 = vst.msk [vmem:[#allocation2 + $0x22] sm:$0xff] %vm197, %v186
        %202 = vst.msk [vmem:[#allocation2 + $0x32] sm:$0xff] %vm197, %v188
        %203 = vst.msk [vmem:[#allocation2 + $0x3a] sm:$0xff] %vm197, %v190
        %v204 = vld [vmem:[#allocation2] sm:$0xff]
        %v205 = vld [vmem:[#allocation2 + $0x8] sm:$0xff]
        %v206 = vld [vmem:[#allocation2 + $0x10] sm:$0xf]
        %v207 = vld [vmem:[#allocation2 + $0x18] sm:$0xff]
        %v208 = vld [vmem:[#allocation2 + $0x20] sm:$0xff]
        %v209 = vld [vmem:[#allocation2 + $0x28] sm:$0xf]
        %v210 = vld [vmem:[#allocation2 + $0x30] sm:$0xff]
        %v211 = vld [vmem:[#allocation2 + $0x38] sm:$0xff]
        %v212 = vld [vmem:[#allocation2 + $0x40] sm:$0xf]
        %v213 = vmul.f32 %v204, 0.2
        %v214 = vmul.f32 %v205, 0.2
        %v215 = vmul.f32 %v206, 0.2
        %v216 = vmul.f32 %v207, 0.2
        %v217 = vmul.f32 %v208, 0.2
        %v218 = vmul.f32 %v209, 0.2
        %v219 = vmul.f32 %v210, 0.2
        %v220 = vmul.f32 %v211, 0.2
        %v221 = vmul.f32 %v212, 0.2
        %231 = vrot.lane.b32.xlu0 %v213, 127
        %v232 = vpop.permute.xlu0 %231
        %233 = vrot.lane.b32.xlu0 %v214, 127
        %v234 = vpop.permute.xlu0 %233
        %235 = vrot.lane.b32.xlu0 %v215, 127
        %v236 = vpop.permute.xlu0 %235
        %237 = vrot.lane.b32.xlu0 %v216, 127
        %v238 = vpop.permute.xlu0 %237
        %239 = vrot.lane.b32.xlu0 %v217, 127
        %v240 = vpop.permute.xlu0 %239
        %241 = vrot.lane.b32.xlu0 %v218, 127
        %v242 = vpop.permute.xlu0 %241
        %243 = vrot.lane.b32.xlu0 %v219, 127
        %v244 = vpop.permute.xlu0 %243
        %245 = vrot.lane.b32.xlu0 %v220, 127
        %v246 = vpop.permute.xlu0 %245
        %247 = vrot.lane.b32.xlu0 %v221, 127
        %v248 = vpop.permute.xlu0 %247
        %v258 = vadd.f32 %v213, %v232
        %v259 = vadd.f32 %v214, %v234
        %v260 = vadd.f32 %v215, %v236
        %v261 = vadd.f32 %v216, %v238
        %v262 = vadd.f32 %v217, %v240
        %v263 = vadd.f32 %v218, %v242
        %v264 = vadd.f32 %v219, %v244
        %v265 = vadd.f32 %v220, %v246
        %v266 = vadd.f32 %v221, %v248
        %267 = vrot.lane.b32.xlu0 %v213, 126
        %v268 = vpop.permute.xlu0 %267
        %269 = vrot.lane.b32.xlu0 %v214, 126
        %v270 = vpop.permute.xlu0 %269
        %271 = vrot.lane.b32.xlu0 %v215, 126
        %v272 = vpop.permute.xlu0 %271
        %273 = vrot.lane.b32.xlu0 %v216, 126
        %v274 = vpop.permute.xlu0 %273
        %275 = vrot.lane.b32.xlu0 %v217, 126
        %v276 = vpop.permute.xlu0 %275
        %277 = vrot.lane.b32.xlu0 %v218, 126
        %v278 = vpop.permute.xlu0 %277
        %279 = vrot.lane.b32.xlu0 %v219, 126
        %v280 = vpop.permute.xlu0 %279
        %281 = vrot.lane.b32.xlu0 %v220, 126
        %v282 = vpop.permute.xlu0 %281
        %283 = vrot.lane.b32.xlu0 %v221, 126
        %v284 = vpop.permute.xlu0 %283
        %v294 = vadd.f32 %v258, %v268
        %v295 = vadd.f32 %v259, %v270
        %v296 = vadd.f32 %v260, %v272
        %v297 = vadd.f32 %v261, %v274
        %v298 = vadd.f32 %v262, %v276
        %v299 = vadd.f32 %v263, %v278
        %v300 = vadd.f32 %v264, %v280
        %v301 = vadd.f32 %v265, %v282
        %v302 = vadd.f32 %v266, %v284
        %303 = vrot.lane.b32.xlu0 %v213, 125
        %v304 = vpop.permute.xlu0 %303
        %305 = vrot.lane.b32.xlu0 %v214, 125
        %v306 = vpop.permute.xlu0 %305
        %307 = vrot.lane.b32.xlu0 %v215, 125
        %v308 = vpop.permute.xlu0 %307
        %309 = vrot.lane.b32.xlu0 %v216, 125
        %v310 = vpop.permute.xlu0 %309
        %311 = vrot.lane.b32.xlu0 %v217, 125
        %v312 = vpop.permute.xlu0 %311
        %313 = vrot.lane.b32.xlu0 %v218, 125
        %v314 = vpop.permute.xlu0 %313
        %315 = vrot.lane.b32.xlu0 %v219, 125
        %v316 = vpop.permute.xlu0 %315
        %317 = vrot.lane.b32.xlu0 %v220, 125
        %v318 = vpop.permute.xlu0 %317
        %319 = vrot.lane.b32.xlu0 %v221, 125
        %v320 = vpop.permute.xlu0 %319
        %v330 = vadd.f32 %v294, %v304
        %v331 = vadd.f32 %v295, %v306
        %v332 = vadd.f32 %v296, %v308
        %v333 = vadd.f32 %v297, %v310
        %v334 = vadd.f32 %v298, %v312
        %v335 = vadd.f32 %v299, %v314
        %v336 = vadd.f32 %v300, %v316
        %v337 = vadd.f32 %v301, %v318
        %v338 = vadd.f32 %v302, %v320
        %339 = vrot.lane.b32.xlu0 %v213, 124
        %v340 = vpop.permute.xlu0 %339
        %341 = vrot.lane.b32.xlu0 %v214, 124
        %v342 = vpop.permute.xlu0 %341
        %343 = vrot.lane.b32.xlu0 %v215, 124
        %v344 = vpop.permute.xlu0 %343
        %345 = vrot.lane.b32.xlu0 %v216, 124
        %v346 = vpop.permute.xlu0 %345
        %347 = vrot.lane.b32.xlu0 %v217, 124
        %v348 = vpop.permute.xlu0 %347
        %349 = vrot.lane.b32.xlu0 %v218, 124
        %v350 = vpop.permute.xlu0 %349
        %351 = vrot.lane.b32.xlu0 %v219, 124
        %v352 = vpop.permute.xlu0 %351
        %353 = vrot.lane.b32.xlu0 %v220, 124
        %v354 = vpop.permute.xlu0 %353
        %355 = vrot.lane.b32.xlu0 %v221, 124
        %v356 = vpop.permute.xlu0 %355
        %v366 = vadd.f32 %v330, %v340
        %v367 = vadd.f32 %v331, %v342
        %v368 = vadd.f32 %v332, %v344
        %v369 = vadd.f32 %v333, %v346
        %v370 = vadd.f32 %v334, %v348
        %v371 = vadd.f32 %v335, %v350
        %v372 = vadd.f32 %v336, %v352
        %v373 = vadd.f32 %v337, %v354
        %v374 = vadd.f32 %v338, %v356
        %vm375 = vcmask 130048
        %376 = vst.msk [vmem:[#allocation3] sm:$0xff] %vm375, %v366
        %377 = vst.msk [vmem:[#allocation3 + $0x8] sm:$0xff] %vm375, %v367
        %vm378 = vcmask 125952
        %379 = vst.msk [vmem:[#allocation3 + $0x10] sm:$0xf] %vm378, %v368
        %380 = vst.msk [vmem:[#allocation3 + $0x18] sm:$0xff] %vm375, %v369
        %381 = vst.msk [vmem:[#allocation3 + $0x20] sm:$0xff] %vm375, %v370
        %382 = vst.msk [vmem:[#allocation3 + $0x28] sm:$0xf] %vm378, %v371
        %383 = vst.msk [vmem:[#allocation3 + $0x30] sm:$0xff] %vm375, %v372
        %384 = vst.msk [vmem:[#allocation3 + $0x38] sm:$0xff] %vm375, %v373
        %385 = vst.msk [vmem:[#allocation3 + $0x40] sm:$0xf] %vm378, %v374
        %v386 = vld [vmem:[#allocation3] sm:$0xff]
        %v387 = vld [vmem:[#allocation3 + $0x8] sm:$0xff]
        %v388 = vld [vmem:[#allocation3 + $0x18] sm:$0xff]
        %v389 = vld [vmem:[#allocation3 + $0x20] sm:$0xff]
        %v390 = vld [vmem:[#allocation3 + $0x30] sm:$0xff]
        %v391 = vld [vmem:[#allocation3 + $0x38] sm:$0xff]
        %v392 = vmul.f32 %v386, 0.2
        %v393 = vmul.f32 %v387, 0.2
        %v394 = vmul.f32 %v388, 0.2
        %v395 = vmul.f32 %v389, 0.2
        %v396 = vmul.f32 %v390, 0.2
        %v397 = vmul.f32 %v391, 0.2
        %v398 = vld [vmem:[#allocation3 + $0x1] sm:$0xff]
        %v399 = vld [vmem:[#allocation3 + $0x9] sm:$0xff]
        %v400 = vld [vmem:[#allocation3 + $0x19] sm:$0xff]
        %v401 = vld [vmem:[#allocation3 + $0x21] sm:$0xff]
        %v402 = vld [vmem:[#allocation3 + $0x31] sm:$0xff]
        %v403 = vld [vmem:[#allocation3 + $0x39] sm:$0xff]
        %v404 = vmul.f32 %v398, 0.2
        %v405 = vmul.f32 %v399, 0.2
        %v406 = vmul.f32 %v400, 0.2
        %v407 = vmul.f32 %v401, 0.2
        %v408 = vmul.f32 %v402, 0.2
        %v409 = vmul.f32 %v403, 0.2
        %v410 = vadd.f32 %v392, %v404
        %v411 = vadd.f32 %v393, %v405
        %v412 = vadd.f32 %v394, %v406
        %v413 = vadd.f32 %v395, %v407
        %v414 = vadd.f32 %v396, %v408
        %v415 = vadd.f32 %v397, %v409
        %v416 = vld [vmem:[#allocation3 + $0x2] sm:$0xff]
        %v417 = vld [vmem:[#allocation3 + $0xa] sm:$0xff]
        %v418 = vld [vmem:[#allocation3 + $0x1a] sm:$0xff]
        %v419 = vld [vmem:[#allocation3 + $0x22] sm:$0xff]
        %v420 = vld [vmem:[#allocation3 + $0x32] sm:$0xff]
        %v421 = vld [vmem:[#allocation3 + $0x3a] sm:$0xff]
        %v422 = vmul.f32 %v416, 0.2
        %v423 = vmul.f32 %v417, 0.2
        %v424 = vmul.f32 %v418, 0.2
        %v425 = vmul.f32 %v419, 0.2
        %v426 = vmul.f32 %v420, 0.2
        %v427 = vmul.f32 %v421, 0.2
        %v428 = vadd.f32 %v410, %v422
        %v429 = vadd.f32 %v411, %v423
        %v430 = vadd.f32 %v412, %v424
        %v431 = vadd.f32 %v413, %v425
        %v432 = vadd.f32 %v414, %v426
        %v433 = vadd.f32 %v415, %v427
        %v434 = vld [vmem:[#allocation3 + $0x3] sm:$0xff]
        %v435 = vld [vmem:[#allocation3 + $0xb] sm:$0xff]
        %v436 = vld [vmem:[#allocation3 + $0x1b] sm:$0xff]
        %v437 = vld [vmem:[#allocation3 + $0x23] sm:$0xff]
        %v438 = vld [vmem:[#allocation3 + $0x33] sm:$0xff]
        %v439 = vld [vmem:[#allocation3 + $0x3b] sm:$0xff]
        %v440 = vmul.f32 %v434, 0.2
        %v441 = vmul.f32 %v435, 0.2
        %v442 = vmul.f32 %v436, 0.2
        %v443 = vmul.f32 %v437, 0.2
        %v444 = vmul.f32 %v438, 0.2
        %v445 = vmul.f32 %v439, 0.2
        %v446 = vadd.f32 %v428, %v440
        %v447 = vadd.f32 %v429, %v441
        %v448 = vadd.f32 %v430, %v442
        %v449 = vadd.f32 %v431, %v443
        %v450 = vadd.f32 %v432, %v444
        %v451 = vadd.f32 %v433, %v445
        %v452 = vld [vmem:[#allocation3 + $0x4] sm:$0xff]
        %v453 = vld [vmem:[#allocation3 + $0xc] sm:$0xff]
        %v454 = vld [vmem:[#allocation3 + $0x1c] sm:$0xff]
        %v455 = vld [vmem:[#allocation3 + $0x24] sm:$0xff]
        %v456 = vld [vmem:[#allocation3 + $0x34] sm:$0xff]
        %v457 = vld [vmem:[#allocation3 + $0x3c] sm:$0xff]
        %v458 = vmul.f32 %v452, 0.2
        %v459 = vmul.f32 %v453, 0.2
        %v460 = vmul.f32 %v454, 0.2
        %v461 = vmul.f32 %v455, 0.2
        %v462 = vmul.f32 %v456, 0.2
        %v463 = vmul.f32 %v457, 0.2
        %v464 = vadd.f32 %v446, %v458
        %v465 = vadd.f32 %v447, %v459
        %v466 = vadd.f32 %v448, %v460
        %v467 = vadd.f32 %v449, %v461
        %v468 = vadd.f32 %v450, %v462
        %v469 = vadd.f32 %v451, %v463
        %470 = vst.msk [vmem:[%s135] sm:$0xff] %vm375, %v464
        %471 = vst.msk [vmem:[%s135 + $0x8] sm:$0xff] %vm375, %v465
        %472 = vst.msk [vmem:[%s135 + $0x10] sm:$0xff] %vm375, %v466
        %473 = vst.msk [vmem:[%s135 + $0x18] sm:$0xff] %vm375, %v467
        %474 = vst.msk [vmem:[%s135 + $0x20] sm:$0xff] %vm375, %v468
        %475 = vst.msk [vmem:[%s135 + $0x28] sm:$0xff] %vm375, %v469
        %s476 = sand.u32 %s52, 1
        %s477 = scalar_lea.sflag [#allocation6], %s476
        %s478 = sand.u32 %s52, 1
        %s479 = smul.addr %s478, 48
        %s480 = scalar_lea.vmem [#allocation7], %s479
        // Predicated region
        $region29: #{tpu_custom_call.1} parent=23 // pred_check
          %p481 = pneg %p62
        $region30: #{tpu_custom_call.1} parent=23 // pred_check_branch
          %483 = sbr.rel (%p481) target = $region32
        $region31: #{tpu_custom_call.1} parent=23 // pred_region
          %s484 = smul.u32 3, %s18
          %s486 = ssub.s32 768, 768
          %487 = vsyncadd %s477, %s486
          %s488 = smul.addr %s484, 2
          %s489 = smul.addr %s488, 128
          %s490 = scalar_lea.hbm %s1, %s489
          %s491 = sshll.u32 %s480, 4
          %s492 = int_to_ptr.vmem [resolvable:$true] %s491
          %497 = dma.vmem_to_hbm [thread:$0]  %s492, 768, %s490, %s477, 128, 128, 8
        $region32: #{tpu_custom_call.1} parent=23 // pred_fallthru
          _
      $region24: #{tpu_custom_call.1} parent=5 // pred_fallthru
        _
      %p498 = scmp.le.s32.totalorder 2, %s13
      // Predicated region
      $region33: #{tpu_custom_call.1} parent=5 // pred_check
        %p499 = pneg %p498
      $region34: #{tpu_custom_call.1} parent=5 // pred_check_branch
        %501 = sbr.rel (%p499) target = $region36
      $region35: #{tpu_custom_call.1} parent=5 // pred_region
        %s502 = ssub.s32 %s13, 2
        // Predicated region
        $region37: #{tpu_custom_call.1} parent=35 // pred_check
          %p503 = pneg %p68
        $region38: #{tpu_custom_call.1} parent=35 // pred_check_branch
          %505 = sbr.rel (%p503) target = $region40
        $region39: #{tpu_custom_call.1} parent=35 // pred_region
          %s506 = sand.u32 %s53, 1
          %s507 = scalar_lea.sflag [#allocation6], %s506
          %s508 = sand.u32 %s53, 1
          %s509 = smul.addr %s508, 48
          %s510 = scalar_lea.vmem [#allocation7], %s509
          %511 = dma.done %s507, 768
        $region40: #{tpu_custom_call.1} parent=35 // pred_fallthru
          _
      $region36: #{tpu_custom_call.1} parent=5 // pred_fallthru
        _
    $region6: #{tpu_custom_call.1} parent=1 // loop_footer
      %s17 = sadd.s32 1, %s13
    $region7: #{tpu_custom_call.1} parent=1 // loop_footer_branch
      %12 = sbr.rel target = $region3
    $region8: #{tpu_custom_call.1} parent=1 // loop_exit
      _
    %512 = vsyncpa [#allocation5], 1
    %s513 = scalar_lea.sflag [#allocation5], 1
    %514 = vsyncpa %s513, 1
    %515 = vsyncpa [#allocation6], 1
    %s516 = scalar_lea.sflag [#allocation6], 1
    %517 = vsyncpa %s516, 1

</llo_original>
